<compile_context>
chip_gen: v5e
topology: v5e:2x2
jax: 0.10.0
libtpu: 0.0.40
codegen_flags: <defaults>
</compile_context>

<pallas_src>
import functools

import jax
import jax.numpy as jnp
from jax.experimental import pallas as pl
from jax.experimental.pallas import tpu as pltpu

_LANE = 128
_TARGET_CHUNK_BYTES = 256 * 1024          # f32 temp per inner accumulation chunk
_MIN_PALLAS_ELEMS = 1 << 20               # below this, plain XLA is faster
_VMEM_LIMIT_BYTES = 32 * 1024 * 1024      # safe on v5e/v6e/v7x
_SUPPORTED_DTYPES = (jnp.dtype(jnp.float32), jnp.dtype(jnp.bfloat16),
                     jnp.dtype(jnpp := jnp.float16))


def _cdiv(a: int, b: int) -> int:
    return -(-a // b)


def _round_up(x: int, m: int) -> int:
    return ((x + m - 1) // m) * m


def _target_block_bytes() -> int:
    """Per-block VMEM budget (double-buffered by the pipeline)."""
    try:
        kind = jax.devices()[0].device_kind.lower()
    except Exception:  # pragma: no cover
        return 4 << 20
    # Older generations: smaller default scoped VMEM / lower HBM BW -> 4 MiB.
    if any(v in kind for v in ("v2", "v3", "v4", "v5")):
        return 4 << 20
    return 8 << 20      # v6e / v7x: amortize the ~0.35us step cost harder


def _sumsq_kernel(x_ref, o_ref, *, rows, tile_rows, chunk_rows, n_chunks,
                  mask_tail):
    """Sum of squares of one (tile_rows, W) row tile -> its own (1, W) slot.

    Upcasts + squares + reduces in f32 over `chunk_rows`-row sub-chunks so the
    f32 temporaries stay small even for multi-MiB bf16 tiles.  Only the last
    grid tile pays for the ragged-tail row mask.
    """
    w = x_ref.shape[1]
    i = pl.program_id(0)

    def tile_sumsq(masked):
        def body(c, acc):
            start = pl.multiple_of(c * chunk_rows, chunk_rows)
            x = x_ref[pl.ds(start, chunk_rows), :].astype(jnp.float32)
            if masked:
                ridx = (i * tile_rows + start) + jax.lax.broadcasted_iota(
                    jnp.int32, (chunk_rows, w), 0)
                x = jnp.where(ridx < rows, x, 0.0)   # mask BEFORE squaring
            return acc + jnp.sum(x * x, axis=0, keepdims=True)

        return jax.lax.fori_loop(0, n_chunks, body,
                                 jnp.zeros((1, w), jnp.float32),
                                 unroll=n_chunks <= 8)

    if mask_tail:
        last = pl.num_programs(0) - 1

        @pl.when(i != last)
        def _():
            o_ref[...] = tile_sumsq(False)

        @pl.when(i == last)
        def _():
            o_ref[...] = tile_sumsq(True)
    else:
        o_ref[...] = tile_sumsq(False)


def _lane_friendly_view(e):
    """Cheap (copy-free for contiguous arrays) 2D view of an embedding."""
    n = int(e.size)
    if e.ndim >= 2 and e.shape[-1] % _LANE == 0:
        return e.reshape(-1, e.shape[-1])
    if n % _LANE == 0:
        return e.reshape(n // _LANE, _LANE)
    if e.ndim >= 2:
        return e.reshape(-1, e.shape[-1])     # full last dim: legal lane layout
    return e.reshape(1, n)


def _sumsq_xla(e):
    return jnp.sum(jnp.square(e.astype(jnp.float32)))


def _sumsq(e, force_pallas: bool) -> jax.Array:
    """Sum of squares of one embedding (f32 scalar)."""
    n = int(e.size)
    if n == 0:
        return jnp.zeros((), jnp.float32)
    if jnp.dtype(e.dtype) not in _SUPPORTED_DTYPES:
        return _sumsq_xla(e)
    if n < _MIN_PALLAS_ELEMS and not force_pallas:
        return _sumsq_xla(e)

    view = _lane_friendly_view(e)
    rows, w = int(view.shape[0]), int(view.shape[1])
    itemsize = jnp.dtype(view.dtype).itemsize
    sublane = 32 // itemsize                    # 8 rows/vreg f32, 16 bf16/f16
    w_lanes = _round_up(w, _LANE)               # VMEM lane padding of a row
    target_block = _target_block_bytes()

    # Pathological very-wide rows: a single sublane group would blow VMEM.
    if sublane * w_lanes * 4 > 2 * target_block:
        return _sumsq_xla(e)

    rows_padded = _round_up(rows, sublane)

    # Inner chunk: ~256 KiB of f32 temp, a whole number of sublane groups.
    chunk_rows = (_TARGET_CHUNK_BYTES // (w_lanes * 4)) // sublane * sublane
    chunk_rows = max(sublane, min(chunk_rows, rows_padded))

    # Row tile: ~4-8 MiB of VMEM per block, a whole number of chunks, no more
    # than the embedding needs.
    budget_rows = (target_block // (w_lanes * itemsize)) // chunk_rows * chunk_rows
    tile_rows = max(chunk_rows,
                    min(budget_rows, _round_up(rows_padded, chunk_rows)))
    num_tiles = _cdiv(rows, tile_rows)

    # Keep small tile counts even so the two v7x TensorCores split the HBM
    # stream evenly across the "parallel" grid axis.
    if 1 < num_tiles < 16 and num_tiles % 2 == 1:
        tr = _round_up(_cdiv(rows, num_tiles + 1), chunk_rows)
        if chunk_rows <= tr <= tile_rows:
            tile_rows = tr
            num_tiles = _cdiv(rows, tile_rows)

    n_chunks = tile_rows // chunk_rows
    mask_tail = (num_tiles * tile_rows) != rows

    kernel = functools.partial(
        _sumsq_kernel, rows=rows, tile_rows=tile_rows, chunk_rows=chunk_rows,
        n_chunks=n_chunks, mask_tail=mask_tail)

    partials = pl.pallas_call(
        kernel,
        out_shape=jax.ShapeDtypeStruct((num_tiles, w), jnp.float32),
        grid=(num_tiles,),
        in_specs=[pl.BlockSpec((tile_rows, w), lambda i: (i, 0))],
        out_specs=pl.BlockSpec((1, w), lambda i: (i, 0)),
        compiler_params=pltpu.CompilerParams(
            dimension_semantics=("parallel",),
            vmem_limit_bytes=_VMEM_LIMIT_BYTES,
        ),
    )(view)                                     # (num_tiles, w) lane partials

    return jnp.sum(partials)                    # tiny XLA epilogue


def emb_loss(*embeddings, norm: int = 2, force_pallas: bool = False) -> jax.Array:
    """EmbLoss.forward: (sum_i ||emb_i||_p) / embeddings[-1].shape[0], shape (1,)."""
    assert embeddings, "EmbLoss needs at least one embedding"
    assert norm == 2, "only the default p=2 (Frobenius) norm is implemented"
    # TODO(synk): p != 2 norms would need an in-kernel |x|**p reduction.

    batch = embeddings[-1].shape[0]
    norms = jnp.stack([jnp.sqrt(_sumsq(e, force_pallas)) for e in embeddings])
    return (jnp.sum(norms) / batch).astype(jnp.float32).reshape(1)


if __name__ == "__main__":
    key = jax.random.PRNGKey(0)
    k1, k2, k3, k4 = jax.random.split(key, 4)

    # Two embedding batches (batch, hidden), as DPGNN feeds user/item embeddings.
    user_emb = jax.random.normal(k1, (128, 32), dtype=jnp.float32)
    item_emb = jax.random.normal(k2, (64, 32), dtype=jnp.float32)

    loss = emb_loss(user_emb, item_emb, force_pallas=True)
    jax.block_until_ready(loss)
    ref = (jnp.linalg.norm(user_emb) + jnp.linalg.norm(item_emb)) / item_emb.shape[0]
    assert loss.shape == (1,)
    assert jnp.allclose(loss[0], ref, rtol=1e-5, atol=1e-6), (loss, ref)

    # Ragged shapes (not multiples of 8 / 128) exercise the masked-tail path.
    a = jax.random.normal(k3, (50, 33), dtype=jnp.float32)
    b = jax.random.normal(k4, (21, 7), dtype=jnp.float32)
    loss2 = emb_loss(a, b, force_pallas=True)
    jax.block_until_ready(loss2)
    ref2 = (jnp.linalg.norm(a) + jnp.linalg.norm(b)) / b.shape[0]
    assert jnp.allclose(loss2[0], ref2, rtol=1e-5, atol=1e-6), (loss2, ref2)

    # bf16 path: native-dtype HBM stream, f32 chunked accumulation in-kernel.
    c = jax.random.normal(k3, (96, 64), dtype=jnp.float32).astype(jnp.bfloat16)
    d = jax.random.normal(k4, (48, 64), dtype=jnp.float32).astype(jnp.bfloat16)
    loss3 = emb_loss(c, d, force_pallas=True)
    jax.block_until_ready(loss3)
    ref3 = (jnp.sqrt(jnp.sum(jnp.square(c.astype(jnp.float32)))) +
            jnp.sqrt(jnp.sum(jnp.square(d.astype(jnp.float32))))) / d.shape[0]
    assert jnp.allclose(loss3[0], ref3, rtol=1e-4, atol=1e-5), (loss3, ref3)

    print("KERNEL_OK")
</pallas_src>

<mosaic_0001>
module attributes {stable_mosaic.version = 11 : i64} {
  func.func @_sumsq_kernel(%arg0: i32, %arg1: memref<32x128xf32, #tpu.memory_space<vmem>>, %arg2: memref<1x128xf32, #tpu.memory_space<vmem>>) attributes {dimension_semantics = [#tpu.dimension_semantics<parallel>], iteration_bounds = array<i64: 1>, scalar_prefetch = 0 : i64, scratch_operands = 0 : i64, tpu.core_type = #tpu.core_type<tc>, window_params = [{transform_indices = @transform_0, window_bounds = array<i64: 32, 128>}, {transform_indices = @transform_1, window_bounds = array<i64: 1, 128>}]} {
    %cst = arith.constant 0.000000e+00 : f32
    %0 = vector.broadcast %cst : f32 to vector<1x128xf32>
    %c0_i32 = arith.constant 0 : i32
    %c32_i32 = arith.constant 32 : i32
    %1 = arith.muli %c0_i32, %c32_i32 : i32
    %2 = tpu.assume_multiple %1, 32 : i32
    %3 = arith.index_cast %2 : i32 to index
    %c0 = arith.constant 0 : index
    %4 = vector.load %arg1[%3, %c0] : memref<32x128xf32, #tpu.memory_space<vmem>>, vector<32x128xf32>
    %5 = arith.mulf %4, %4 : vector<32x128xf32>
    %cst_0 = arith.constant dense<0.000000e+00> : vector<128xf32>
    %6 = vector.multi_reduction <add>, %5, %cst_0 [0] : vector<32x128xf32> to vector<128xf32>
    %7 = vector.shape_cast %6 : vector<128xf32> to vector<1x128xf32>
    %8 = arith.addf %0, %7 : vector<1x128xf32>
    %c1_i32 = arith.constant 1 : i32
    %c0_1 = arith.constant 0 : index
    %c0_2 = arith.constant 0 : index
    %9 = vector.load %arg2[%c0_1, %c0_2] : memref<1x128xf32, #tpu.memory_space<vmem>>, vector<1x128xf32>
    tpu.vector_store %arg2[%c0_1, %c0_2], %8 {strides = array<i32>} : memref<1x128xf32, #tpu.memory_space<vmem>>, vector<1x128xf32>,
    return
  }
  func.func @transform_0(%arg0: i32) -> (i32, i32) {
    %c0_i32 = arith.constant 0 : i32
    %c0_i32_0 = arith.constant 0 : i32
    return %arg0, %c0_i32 : i32, i32
  }
  func.func @transform_1(%arg0: i32) -> (i32, i32) {
    %c0_i32 = arith.constant 0 : i32
    %c0_i32_0 = arith.constant 0 : i32
    return %arg0, %c0_i32 : i32, i32
  }
}

</mosaic_0001>

<llo_original>
// kernel: tpu_custom_call.1
$region0: #{tpu_custom_call.1}
  #allocation0 [shape = 'u32[]', space=smem, size = 0x4, offset = 0x4, fixed_abs, tag = 'smem constant byte address 0x4 - core index']
  #allocation1 [shape = 'u32[72,128]{1,0:T(1,128)}', space=vmem, size = 0x9000, scoped, tag = 'internal scratch']
  %s0 = inlined_call_operand.hbm [shape: f32[32,128], index: 0, kind: input, shape index: {}]
  %s1 = inlined_call_operand.hbm [shape: f32[1,128], index: 1, kind: output, shape index: {}]
  %s2 = sld [smem:[#allocation0]]
  $region18: #{tpu_custom_call.1} parent=0
    _
  %s4 = ssub.s32 1, %s2
  %s5 = scalar_select 0, %s4, %s2
  $region1: #{tpu_custom_call.1} parent=0
    #allocation2 [shape = 'u8[16384]{0}', space=vmem, size = 0x4000, scoped, tag = 'input window, operand 0, single buffered']
    #allocation3 [shape = 's32[1]{0}', space=sflag, size = 0x4, scoped, tag = 'scoped memory for tpu_custom_call.1']
    #allocation4 [shape = 's32[1]{0}', space=sflag, size = 0x4, scoped, tag = 'scoped memory for tpu_custom_call.1']
    #allocation5 [shape = 'u8[512]{0}', space=vmem, size = 0x400, scoped, tag = 'output window, operand 0, single buffered']
    %6 = vsyncpa [#allocation3], 0
    %7 = vsyncpa [#allocation4], 0
    // Predicated region
    $region2: #{tpu_custom_call.1} parent=1 // pred_check
      _
    $region3: #{tpu_custom_call.1} parent=1 // pred_check_branch
      %9 = sbr.rel (0) target = $region5
    $region4: #{tpu_custom_call.1} parent=1 // pred_region
      %11 = vsyncadd [#allocation3], 0
      %s12 = sshll.u32 %s0, 4
      %s13 = int_to_ptr.hbm [resolvable:$true] %s12
      %s14 = sshll.u32 [#allocation2], 4
      %s15 = int_to_ptr.vmem [resolvable:$true] %s14
      %20 = dma.hbm_to_vmem [thread:$0]  %s13, 512, %s15, [#allocation3], 128, 128, 8
    $region5: #{tpu_custom_call.1} parent=1 // pred_fallthru
      _
    // Predicated region
    $region6: #{tpu_custom_call.1} parent=1 // pred_check
      _
    $region7: #{tpu_custom_call.1} parent=1 // pred_check_branch
      %22 = sbr.rel (0) target = $region9
    $region8: #{tpu_custom_call.1} parent=1 // pred_region
      %24 = dma.done [#allocation3], 512
    $region9: #{tpu_custom_call.1} parent=1 // pred_fallthru
      _
    %v25 = vld [vmem:[#allocation2] sm:$0xff]
    %v26 = vld [vmem:[#allocation2 + $0x8] sm:$0xff]
    %v27 = vld [vmem:[#allocation2 + $0x10] sm:$0xff]
    %v28 = vld [vmem:[#allocation2 + $0x18] sm:$0xff]
    %v29 = vmul.f32 %v25, %v25
    %v30 = vmul.f32 %v26, %v26
    %v31 = vmul.f32 %v27, %v27
    %v32 = vmul.f32 %v28, %v28
    %v33 = vadd.f32 %v29, %v30
    %v34 = vadd.f32 %v33, %v31
    %v35 = vadd.f32 %v34, %v32
    %v36 = vrot.slane %v35, 4
    %v37 = vadd.f32 %v35, %v36
    %v38 = vrot.slane %v37, 2
    %v39 = vadd.f32 %v37, %v38
    %v40 = vrot.slane %v39, 1
    %v41 = vadd.f32 %v39, %v40
    %v42 = vadd.f32 %v41, 0.0
    %43 = vst [vmem:[#allocation5] sm:$0x1] %v42
    // Predicated region
    $region10: #{tpu_custom_call.1} parent=1 // pred_check
      _
    $region11: #{tpu_custom_call.1} parent=1 // pred_check_branch
      %45 = sbr.rel (0) target = $region13
    $region12: #{tpu_custom_call.1} parent=1 // pred_region
      %47 = vsyncadd [#allocation4], 0
      %s49 = sshll.u32 [#allocation5], 4
      %s50 = int_to_ptr.vmem [resolvable:$true] %s49
      %s51 = sshll.u32 %s1, 4
      %s52 = int_to_ptr.hbm [resolvable:$true] %s51
      %54 = dma.vmem_to_hbm [thread:$0]  %s50, 16, %s52, [#allocation4]
    $region13: #{tpu_custom_call.1} parent=1 // pred_fallthru
      _
    // Predicated region
    $region14: #{tpu_custom_call.1} parent=1 // pred_check
      _
    $region15: #{tpu_custom_call.1} parent=1 // pred_check_branch
      %56 = sbr.rel (0) target = $region17
    $region16: #{tpu_custom_call.1} parent=1 // pred_region
      %58 = dma.done [#allocation4], 16
    $region17: #{tpu_custom_call.1} parent=1 // pred_fallthru
      _
    %59 = vsyncpa [#allocation3], 1
    %60 = vsyncpa [#allocation4], 1

</llo_original>
